<compile_context>
chip_gen: v7x
topology: tpu7x:2x2x1
jax: 0.10.0
libtpu: 0.0.40
codegen_flags: <defaults>
</compile_context>

<pallas_src>
import functools

import jax
import jax.numpy as jnp
from jax.experimental import pallas as pl
from jax.experimental.pallas import tpu as pltpu


def _round_up(x, m):
    return (x + m - 1) // m * m


# ---------------------------------------------------------------------------
# Kernel bodies
# ---------------------------------------------------------------------------
def gcn_fused_kernel(adj_ref, x_ref, wt_ref, b_ref, o_ref):
    """Small path: whole problem resident in VMEM, no grid."""
    a = adj_ref[...].astype(jnp.float32)          # exact upcast of bf16 {0,1,2}
    h = jnp.dot(a, x_ref[...], preferred_element_type=jnp.float32)
    y = jnp.dot(h, wt_ref[...], preferred_element_type=jnp.float32) + b_ref[...]
    o_ref[...] = jnp.maximum(y, 0.0).astype(o_ref.dtype)


def gcn_tiled_kernel(adj_ref, x_ref, wt_ref, b_ref, o_ref, acc_ref, *,
                     tile_k, x_resident):
    """Tiled path: grid = (row tiles, K tiles over the A@X contraction).

    acc_ref accumulates the [tile_m, Cin_p] slab of h = A@X across K; the
    second matmul + bias + relu only run in the k == last epilogue
    (lane-dense store).  W^T, bias (and X when resident) are grid-invariant
    so they stay in VMEM across the whole grid.
    """
    k = pl.program_id(1)

    @pl.when(k == 0)
    def _init():
        acc_ref[...] = jnp.zeros_like(acc_ref)

    if x_resident:
        off = pl.multiple_of(k * tile_k, tile_k)
        x_blk = x_ref[pl.ds(off, tile_k), :]
    else:
        x_blk = x_ref[...]

    acc_ref[...] += jnp.dot(adj_ref[...].astype(jnp.float32), x_blk,
                            preferred_element_type=jnp.float32)

    @pl.when(k == pl.num_programs(1) - 1)
    def _finalize():
        y = jnp.dot(acc_ref[...], wt_ref[...],
                    preferred_element_type=jnp.float32) + b_ref[...]
        o_ref[...] = jnp.maximum(y, 0.0).astype(o_ref.dtype)


# ---------------------------------------------------------------------------
# Wrapper
# ---------------------------------------------------------------------------
def graph_conv_layer(x, adj, weight, bias, *,
                     tile_m=512, tile_k=512,
                     single_block_max_nodes=1024,
                     adj_storage_dtype=jnp.bfloat16,
                     x_resident_max_bytes=8 * 1024 * 1024):
    """x: [N, Cin], adj: [N, N], weight: [Cout, Cin], bias: [Cout] -> [N, Cout]."""
    x = x.astype(jnp.float32)            # matches x.float() in the PyTorch module
    n, cin = x.shape
    cout = weight.shape[0]

    # Lane-dense intermediates and output: pad both Cin and Cout to 128.
    cin_p = _round_up(cin, 128)
    cout_p = _round_up(cout, 128)
    wt = jnp.zeros((cin_p, cout_p), jnp.float32).at[:cin, :cout].set(
        weight.astype(jnp.float32).T)
    b2 = jnp.zeros((1, cout_p), jnp.float32).at[:, :cout].set(
        bias.astype(jnp.float32))

    adj_itemsize = jnp.dtype(adj_storage_dtype).itemsize

    # ---------------- small path: no grid, everything in VMEM ----------------
    if n <= single_block_max_nodes:
        n_p = _round_up(n, 8)
        adj_p = jnp.zeros((n_p, n_p), adj_storage_dtype).at[:n, :n].set(
            adj.astype(adj_storage_dtype))
        x_p = jnp.zeros((n_p, cin_p), jnp.float32).at[:n, :cin].set(x)

        flops = 2 * n_p * n_p * cin_p + 2 * n_p * cin_p * cout_p
        bytes_accessed = (adj_itemsize * n_p * n_p
                          + 4 * (n_p * cin_p + cin_p * cout_p + cout_p
                                 + n_p * cout_p))
        cost = pl.CostEstimate(flops=flops, transcendentals=0,
                               bytes_accessed=bytes_accessed)

        out = pl.pallas_call(
            gcn_fused_kernel,
            out_shape=jax.ShapeDtypeStruct((n_p, cout_p), jnp.float32),
            in_specs=[pl.BlockSpec(memory_space=pltpu.MemorySpace.VMEM)] * 4,
            out_specs=pl.BlockSpec(memory_space=pltpu.MemorySpace.VMEM),
            compiler_params=pltpu.CompilerParams(
                vmem_limit_bytes=32 * 1024 * 1024),
            cost_estimate=cost,
        )(adj_p, x_p, wt, b2)
        return out[:n, :cout]

    # ---------------- tiled path: (rows parallel) x (K reduction last) -------
    # Clamp tiles to the (128-rounded) problem so small-N cases don't over-pad.
    tile_m = min(tile_m, _round_up(n, 128))
    tile_k = min(tile_k, _round_up(n, 128))
    n_rows_p = _round_up(n, tile_m)      # rectangular pad: rows to tile_m,
    n_cols_p = _round_up(n, tile_k)      # cols (reduction dim) to tile_k.

    adj_s = adj.astype(adj_storage_dtype)
    if (n_rows_p, n_cols_p) != (n, n):   # only materialize a padded copy if needed
        adj_s = jnp.zeros((n_rows_p, n_cols_p), adj_storage_dtype
                          ).at[:n, :n].set(adj_s)
    if (n_cols_p, cin_p) != (n, cin):
        x_p = jnp.zeros((n_cols_p, cin_p), jnp.float32).at[:n, :cin].set(x)
    else:
        x_p = x

    grid = (n_rows_p // tile_m, n_cols_p // tile_k)

    # X fully VMEM-resident (grid-invariant block) unless it is too large.
    x_resident = (n_cols_p * cin_p * 4) <= x_resident_max_bytes
    if x_resident:
        x_spec = pl.BlockSpec((n_cols_p, cin_p), lambda i, k: (0, 0))
    else:
        x_spec = pl.BlockSpec((tile_k, cin_p), lambda i, k: (k, 0))

    flops = 2 * n_rows_p * n_cols_p * cin_p + 2 * n_rows_p * cin_p * cout_p
    bytes_accessed = (adj_itemsize * n_rows_p * n_cols_p
                      + 4 * (n_cols_p * cin_p + cin_p * cout_p + cout_p
                             + n_rows_p * cout_p))
    cost = pl.CostEstimate(flops=flops, transcendentals=0,
                           bytes_accessed=bytes_accessed)

    kernel = functools.partial(gcn_tiled_kernel, tile_k=tile_k,
                               x_resident=x_resident)

    out = pl.pallas_call(
        kernel,
        out_shape=jax.ShapeDtypeStruct((n_rows_p, cout_p), jnp.float32),
        grid_spec=pltpu.PrefetchScalarGridSpec(
            num_scalar_prefetch=0,
            grid=grid,
            in_specs=[
                pl.BlockSpec((tile_m, tile_k), lambda i, k: (i, k)),  # adj tile
                x_spec,                                               # X (resident/stream)
                pl.BlockSpec((cin_p, cout_p), lambda i, k: (0, 0)),   # W^T resident
                pl.BlockSpec((1, cout_p), lambda i, k: (0, 0)),       # bias resident
            ],
            out_specs=pl.BlockSpec((tile_m, cout_p), lambda i, k: (i, 0)),
            scratch_shapes=[pltpu.VMEM((tile_m, cin_p), jnp.float32)],
        ),
        compiler_params=pltpu.CompilerParams(
            dimension_semantics=("parallel", "arbitrary"),
            vmem_limit_bytes=48 * 1024 * 1024,
        ),
        cost_estimate=cost,
    )(adj_s, x_p, wt, b2)
    return out[:n, :cout]


# ---------------------------------------------------------------------------
# Reference (pure JAX, mirrors the PyTorch forward)
# ---------------------------------------------------------------------------
def reference(x, adj, weight, bias):
    h = adj.astype(jnp.float32) @ x.astype(jnp.float32)
    y = h @ weight.astype(jnp.float32).T + bias.astype(jnp.float32)
    return jnp.maximum(y, 0.0)


def _make_inputs(key, n, cin, cout, density=0.7):
    k_x, k_adj, k_w, k_b = jax.random.split(key, 4)
    x = jax.random.normal(k_x, (n, cin), dtype=jnp.float32)
    a_raw = (jax.random.uniform(k_adj, (n, n)) > density).astype(jnp.float32)
    adj = a_raw + a_raw.T + jnp.eye(n, dtype=jnp.float32)   # values in {0,1,2,3}
    bound = 1.0 / (cin ** 0.5)
    w = jax.random.uniform(k_w, (cout, cin), minval=-bound, maxval=bound,
                           dtype=jnp.float32)
    b = jax.random.uniform(k_b, (cout,), minval=-bound, maxval=bound,
                           dtype=jnp.float32)
    return x, adj, w, b


if __name__ == "__main__":
    key = jax.random.PRNGKey(0)
    k1, k2, k3 = jax.random.split(key, 3)

    # ---- Test 1: small problem, no-grid VMEM-resident path ------------------
    N, IN_F, OUT_F = 16, 8, 32
    x, adj, w, b = _make_inputs(k1, N, IN_F, OUT_F)
    out = jax.block_until_ready(graph_conv_layer(x, adj, w, b))
    ref = reference(x, adj, w, b)
    assert out.shape == (N, OUT_F)
    assert jnp.allclose(out, ref, atol=1e-3, rtol=1e-3), "small-path mismatch"

    # ---- Test 2: tiled accumulator path (tiles clamped to problem size) -----
    N2, IN_F2, OUT_F2 = 256, 64, 32
    x2, adj2, w2, b2 = _make_inputs(k2, N2, IN_F2, OUT_F2, density=0.9)
    out2 = jax.block_until_ready(
        graph_conv_layer(x2, adj2, w2, b2, single_block_max_nodes=0))
    ref2 = reference(x2, adj2, w2, b2)
    assert out2.shape == (N2, OUT_F2)
    assert jnp.allclose(out2, ref2, atol=1e-3, rtol=1e-3), "tiled-path mismatch"

    # ---- Test 3: tiled path with rectangular padding + multi-step K ---------
    N3, IN_F3, OUT_F3 = 200, 48, 24
    x3, adj3, w3, b3 = _make_inputs(k3, N3, IN_F3, OUT_F3, density=0.85)
    out3 = jax.block_until_ready(
        graph_conv_layer(x3, adj3, w3, b3, tile_m=128, tile_k=128,
                         single_block_max_nodes=0))
    ref3 = reference(x3, adj3, w3, b3)
    assert out3.shape == (N3, OUT_F3)
    assert jnp.allclose(out3, ref3, atol=1e-3, rtol=1e-3), "padded-path mismatch"

    print("KERNEL_OK")
</pallas_src>

<mosaic_0001>
module attributes {stable_mosaic.version = 11 : i64} {
  func.func @gcn_fused_kernel(%arg0: memref<16x16xbf16, #tpu.memory_space<vmem>>, %arg1: memref<16x128xf32, #tpu.memory_space<vmem>>, %arg2: memref<128x128xf32, #tpu.memory_space<vmem>>, %arg3: memref<1x128xf32, #tpu.memory_space<vmem>>, %arg4: memref<16x128xf32, #tpu.memory_space<vmem>>) attributes {dimension_semantics = [], scalar_prefetch = 0 : i64, scratch_operands = 0 : i64, tpu.core_type = #tpu.core_type<tc>} {
    %c0 = arith.constant 0 : index
    %c0_0 = arith.constant 0 : index
    %0 = vector.load %arg0[%c0, %c0_0] : memref<16x16xbf16, #tpu.memory_space<vmem>>, vector<16x16xbf16>
    %1 = arith.extf %0 : vector<16x16xbf16> to vector<16x16xf32>
    %c0_1 = arith.constant 0 : index
    %c0_2 = arith.constant 0 : index
    %2 = vector.load %arg1[%c0_1, %c0_2] : memref<16x128xf32, #tpu.memory_space<vmem>>, vector<16x128xf32>
    %cst = arith.constant dense<0.000000e+00> : vector<16x128xf32>
    %3 = tpu.matmul %1, %2, %cst {dimension_numbers = #tpu.dot_dimension_numbers<[1], [0], [0], [1], [0, 0, 1, 1], [], []>} : vector<16x16xf32>, vector<16x128xf32>, vector<16x128xf32> -> vector<16x128xf32>
    %c0_3 = arith.constant 0 : index
    %c0_4 = arith.constant 0 : index
    %4 = vector.load %arg2[%c0_3, %c0_4] : memref<128x128xf32, #tpu.memory_space<vmem>>, vector<128x128xf32>
    %cst_5 = arith.constant dense<0.000000e+00> : vector<16x128xf32>
    %5 = tpu.matmul %3, %4, %cst_5 {dimension_numbers = #tpu.dot_dimension_numbers<[1], [0], [0], [1], [0, 0, 1, 1], [], []>} : vector<16x128xf32>, vector<128x128xf32>, vector<16x128xf32> -> vector<16x128xf32>
    %c0_6 = arith.constant 0 : index
    %c0_7 = arith.constant 0 : index
    %6 = vector.load %arg3[%c0_6, %c0_7] : memref<1x128xf32, #tpu.memory_space<vmem>>, vector<1x128xf32>
    %7 = vector.broadcast %6 : vector<1x128xf32> to vector<16x128xf32>
    %8 = arith.addf %5, %7 : vector<16x128xf32>
    %cst_8 = arith.constant 0.000000e+00 : f32
    %9 = vector.broadcast %cst_8 : f32 to vector<16x128xf32>
    %10 = arith.maximumf %8, %9 : vector<16x128xf32>
    %c0_9 = arith.constant 0 : index
    %c0_10 = arith.constant 0 : index
    %11 = vector.load %arg4[%c0_9, %c0_10] : memref<16x128xf32, #tpu.memory_space<vmem>>, vector<16x128xf32>
    tpu.vector_store %arg4[%c0_9, %c0_10], %10 {strides = array<i32>} : memref<16x128xf32, #tpu.memory_space<vmem>>, vector<16x128xf32>,
    return
  }
}

</mosaic_0001>

<llo_original>
// kernel: tpu_custom_call.1
$region0: #{tpu_custom_call.1}
  #allocation0 [shape = 'u32[]', space=smem, size = 0x4, offset = 0x4, fixed_abs, tag = 'smem constant byte address 0x4 - core index']
  #allocation1 [shape = 'u32[144,128]{1,0:T(1,128)}', space=vmem, size = 0x12000, scoped, tag = 'internal scratch']
  %s0 = inlined_call_operand.hbm [shape: bf16[16,16], index: 0, kind: input, shape index: {}]
  %s1 = inlined_call_operand.hbm [shape: f32[16,128], index: 1, kind: input, shape index: {}]
  %s2 = inlined_call_operand.hbm [shape: f32[128,128], index: 2, kind: input, shape index: {}]
  %s3 = inlined_call_operand.vmem [shape: f32[1,128], index: 3, kind: input, shape index: {}]
  %s4 = inlined_call_operand.hbm [shape: f32[16,128], index: 4, kind: output, shape index: {}]
  %s5 = sld [smem:[#allocation0]]
  $region38: #{tpu_custom_call.1} parent=0
    _
  %s7 = ssub.s32 1, %s5
  %s8 = scalar_select 0, %s7, %s5
  $region1: #{tpu_custom_call.1} parent=0
    #allocation2 [shape = 'u8[4096]{0}', space=vmem, size = 0x1000, scoped, tag = 'input window, operand 0, single buffered']
    #allocation3 [shape = 's32[1]{0}', space=sflag, size = 0x4, scoped, tag = 'scoped memory for tpu_custom_call.1']
    #allocation4 [shape = 's32[1]{0}', space=sflag, size = 0x4, scoped, tag = 'scoped memory for tpu_custom_call.1']
    #allocation5 [shape = 'u8[8192]{0}', space=vmem, size = 0x2000, scoped, tag = 'input window, operand 1, single buffered']
    #allocation6 [shape = 's32[1]{0}', space=sflag, size = 0x4, scoped, tag = 'scoped memory for tpu_custom_call.1']
    #allocation7 [shape = 'u8[65536]{0}', space=vmem, size = 0x10000, scoped, tag = 'input window, operand 2, single buffered']
    #allocation8 [shape = 'u8[8192]{0}', space=vmem, size = 0x2000, scoped, tag = 'output window, operand 0, single buffered']
    %9 = vsyncpa [#allocation3], 0
    %10 = vsyncpa [#allocation6], 0
    %11 = vsyncpa [#allocation4], 0
    // Predicated region
    $region2: #{tpu_custom_call.1} parent=1 // pred_check
      _
    $region3: #{tpu_custom_call.1} parent=1 // pred_check_branch
      %13 = sbr.rel (0) target = $region5
    $region4: #{tpu_custom_call.1} parent=1 // pred_region
      %s15 = ssub.s32 128, 128
      %16 = vsyncadd [#allocation3], %s15
      %s17 = sshll.u32 [#allocation2], 4
      %s18 = int_to_ptr.vmem [resolvable:$true] %s17
      %23 = dma.hbm_to_vmem [thread:$0]  %s0, 128, %s18, [#allocation3], 64, 64, 4
    $region5: #{tpu_custom_call.1} parent=1 // pred_fallthru
      _
    // Predicated region
    $region6: #{tpu_custom_call.1} parent=1 // pred_check
      _
    $region7: #{tpu_custom_call.1} parent=1 // pred_check_branch
      %25 = sbr.rel (0) target = $region9
    $region8: #{tpu_custom_call.1} parent=1 // pred_region
      %s27 = ssub.s32 256, 256
      %28 = vsyncadd [#allocation6], %s27
      %s29 = sshll.u32 [#allocation5], 4
      %s30 = int_to_ptr.vmem [resolvable:$true] %s29
      %35 = dma.hbm_to_vmem [thread:$0]  %s1, 256, %s30, [#allocation6], 128, 128, 8
    $region9: #{tpu_custom_call.1} parent=1 // pred_fallthru
      _
    // Predicated region
    $region10: #{tpu_custom_call.1} parent=1 // pred_check
      _
    $region11: #{tpu_custom_call.1} parent=1 // pred_check_branch
      %37 = sbr.rel (0) target = $region13
    $region12: #{tpu_custom_call.1} parent=1 // pred_region
      %s39 = ssub.s32 2048, 2048
      %40 = vsyncadd [#allocation6], %s39
      %s41 = sshll.u32 [#allocation7], 4
      %s42 = int_to_ptr.vmem [resolvable:$true] %s41
      %47 = dma.hbm_to_vmem [thread:$0]  %s2, 2048, %s42, [#allocation6], 128, 128, 8
    $region13: #{tpu_custom_call.1} parent=1 // pred_fallthru
      _
    // Predicated region
    $region14: #{tpu_custom_call.1} parent=1 // pred_check
      _
    $region15: #{tpu_custom_call.1} parent=1 // pred_check_branch
      %49 = sbr.rel (0) target = $region17
    $region16: #{tpu_custom_call.1} parent=1 // pred_region
      _
    $region17: #{tpu_custom_call.1} parent=1 // pred_fallthru
      _
    // Predicated region
    $region18: #{tpu_custom_call.1} parent=1 // pred_check
      _
    $region19: #{tpu_custom_call.1} parent=1 // pred_check_branch
      %51 = sbr.rel (0) target = $region21
    $region20: #{tpu_custom_call.1} parent=1 // pred_region
      %52 = dma.done [#allocation3], 128
    $region21: #{tpu_custom_call.1} parent=1 // pred_fallthru
      _
    // Predicated region
    $region22: #{tpu_custom_call.1} parent=1 // pred_check
      _
    $region23: #{tpu_custom_call.1} parent=1 // pred_check_branch
      %54 = sbr.rel (0) target = $region25
    $region24: #{tpu_custom_call.1} parent=1 // pred_region
      %55 = dma.done [#allocation6], 256
    $region25: #{tpu_custom_call.1} parent=1 // pred_fallthru
      _
    // Predicated region
    $region26: #{tpu_custom_call.1} parent=1 // pred_check
      _
    $region27: #{tpu_custom_call.1} parent=1 // pred_check_branch
      %57 = sbr.rel (0) target = $region29
    $region28: #{tpu_custom_call.1} parent=1 // pred_region
      %58 = dma.done [#allocation6], 2048
    $region29: #{tpu_custom_call.1} parent=1 // pred_fallthru
      _
    %v59 = vld [vmem:[#allocation2] sm:$0xf]
    %v60 = vld [vmem:[#allocation2 + $0x4] sm:$0xf]
    %v61 = vunpack.c.l.bf16 %v59
    %v62 = vunpack.c.l.bf16 %v60
    %v63 = vld [vmem:[#allocation5] sm:$0xff]
    %v64 = vld [vmem:[#allocation5 + $0x8] sm:$0xff]
    %vm65 = vcmask 130048
    %v67 = vsel %vm65, %v61, 0
    %v70 = vsel %vm65, %v62, 0
    %72 = vmatprep.subr.mxu0 0.0
    %73 = vmatpush1.msra.mxu0 %v63
    %74 = vmatprep.subr.mxu0 0.0
    %75 = vmatpush1.msra.mxu0 %v64
    %76 = vmatprep.subr.mxu0 0.0
    %77 = vmatpush1.msra.mxu0 0.0
    %78 = vmatprep.subr.mxu0 0.0
    %79 = vmatpush1.msra.mxu0 0.0
    %80 = vmatprep.subr.mxu0 0.0
    %81 = vmatpush1.msra.mxu0 0.0
    %82 = vmatprep.subr.mxu0 0.0
    %83 = vmatpush1.msra.mxu0 0.0
    %84 = vmatprep.subr.mxu0 0.0
    %85 = vmatpush1.msra.mxu0 0.0
    %86 = vmatprep.subr.mxu0 0.0
    %87 = vmatpush1.msra.mxu0 0.0
    %88 = vmatprep.subr.mxu0 0.0
    %89 = vmatpush1.msra.mxu0 0.0
    %90 = vmatprep.subr.mxu0 0.0
    %91 = vmatpush1.msra.mxu0 0.0
    %92 = vmatprep.subr.mxu0 0.0
    %93 = vmatpush1.msra.mxu0 0.0
    %94 = vmatprep.subr.mxu0 0.0
    %95 = vmatpush1.msra.mxu0 0.0
    %96 = vmatprep.subr.mxu0 0.0
    %97 = vmatpush1.msra.mxu0 0.0
    %98 = vmatprep.subr.mxu0 0.0
    %99 = vmatpush1.msra.mxu0 0.0
    %100 = vmatprep.subr.mxu0 0.0
    %101 = vmatpush1.msra.mxu0 0.0
    %102 = vmatprep.subr.mxu0 0.0
    %103 = vmatpush1.msra.mxu0 0.0
    %104 = vmatprep.subr.mxu0 0.0
    %105 = vmatpush1.msra.mxu0 0.0
    %106 = vmatprep.subr.mxu0 0.0
    %107 = vmatpush1.msra.mxu0 0.0
    %108 = vmatprep.subr.mxu0 0.0
    %109 = vmatpush1.msra.mxu0 0.0
    %110 = vmatprep.subr.mxu0 0.0
    %111 = vmatpush1.msra.mxu0 0.0
    %112 = vmatprep.subr.mxu0 0.0
    %113 = vmatpush1.msra.mxu0 0.0
    %114 = vmatprep.subr.mxu0 0.0
    %115 = vmatpush1.msra.mxu0 0.0
    %116 = vmatprep.subr.mxu0 0.0
    %117 = vmatpush1.msra.mxu0 0.0
    %118 = vmatprep.subr.mxu0 0.0
    %119 = vmatpush1.msra.mxu0 0.0
    %120 = vmatprep.subr.mxu0 0.0
    %121 = vmatpush1.msra.mxu0 0.0
    %122 = vmatprep.subr.mxu0 0.0
    %123 = vmatpush1.msra.mxu0 0.0
    %124 = vmatprep.subr.mxu0 0.0
    %125 = vmatpush1.msra.mxu0 0.0
    %126 = vmatprep.subr.mxu0 0.0
    %127 = vmatpush1.msra.mxu0 0.0
    %128 = vmatprep.subr.mxu0 0.0
    %129 = vmatpush1.msra.mxu0 0.0
    %130 = vmatprep.subr.mxu0 0.0
    %131 = vmatpush1.msra.mxu0 0.0
    %132 = vmatprep.subr.mxu0 0.0
    %133 = vmatpush1.msra.mxu0 0.0
    %134 = vmatprep.subr.mxu0 0.0
    %135 = vmatpush1.msra.mxu0 0.0
    %136 = vmatprep.mubr.f32.mxu0 0.0
    %137 = vmatmul.mubr.f32.gmra.mrb[0].mxu0 %v67
    %v138 = vpop.f32.mrb[0].mxu0
    %v139 = vadd.f32 0.0, %v138
    %v140 = vpop.f32.mrb[0].mxu0
    %141 = vmatprep.mubr.f32.mxu0 0.0
    %142 = vmatmul.mubr.f32.gmra.mrb[0].mxu0 %v70
    %v143 = vpop.f32.mrb[0].mxu0
    %v144 = vadd.f32 0.0, %v143
    %v145 = vpop.f32.mrb[0].mxu0
    %146 = vdwg.mxu0
    %v147 = vld [vmem:[#allocation7] sm:$0xff]
    %v148 = vld [vmem:[#allocation7 + $0x8] sm:$0xff]
    %v149 = vld [vmem:[#allocation7 + $0x10] sm:$0xff]
    %v150 = vld [vmem:[#allocation7 + $0x18] sm:$0xff]
    %v151 = vld [vmem:[#allocation7 + $0x20] sm:$0xff]
    %v152 = vld [vmem:[#allocation7 + $0x28] sm:$0xff]
    %v153 = vld [vmem:[#allocation7 + $0x30] sm:$0xff]
    %v154 = vld [vmem:[#allocation7 + $0x38] sm:$0xff]
    %v155 = vld [vmem:[#allocation7 + $0x40] sm:$0xff]
    %v156 = vld [vmem:[#allocation7 + $0x48] sm:$0xff]
    %v157 = vld [vmem:[#allocation7 + $0x50] sm:$0xff]
    %v158 = vld [vmem:[#allocation7 + $0x58] sm:$0xff]
    %v159 = vld [vmem:[#allocation7 + $0x60] sm:$0xff]
    %v160 = vld [vmem:[#allocation7 + $0x68] sm:$0xff]
    %v161 = vld [vmem:[#allocation7 + $0x70] sm:$0xff]
    %v162 = vld [vmem:[#allocation7 + $0x78] sm:$0xff]
    %v163 = vld [vmem:[%s3] sm:$0x1]
    %v165 = vlaneseq
    %v166 = vshrl.u32 %v165, 7
    %v167 = vsub.s32 0, %v166
    %v168 = vrot.slane %v163, %v167
    %170 = vmatprep.subr.mxu0 0.0
    %171 = vmatpush1.msra.mxu0 %v147
    %172 = vmatprep.subr.mxu0 0.0
    %173 = vmatpush1.msra.mxu0 %v148
    %174 = vmatprep.subr.mxu0 0.0
    %175 = vmatpush1.msra.mxu0 %v149
    %176 = vmatprep.subr.mxu0 0.0
    %177 = vmatpush1.msra.mxu0 %v150
    %178 = vmatprep.subr.mxu0 0.0
    %179 = vmatpush1.msra.mxu0 %v151
    %180 = vmatprep.subr.mxu0 0.0
    %181 = vmatpush1.msra.mxu0 %v152
    %182 = vmatprep.subr.mxu0 0.0
    %183 = vmatpush1.msra.mxu0 %v153
    %184 = vmatprep.subr.mxu0 0.0
    %185 = vmatpush1.msra.mxu0 %v154
    %186 = vmatprep.subr.mxu0 0.0
    %187 = vmatpush1.msra.mxu0 %v155
    %188 = vmatprep.subr.mxu0 0.0
    %189 = vmatpush1.msra.mxu0 %v156
    %190 = vmatprep.subr.mxu0 0.0
    %191 = vmatpush1.msra.mxu0 %v157
    %192 = vmatprep.subr.mxu0 0.0
    %193 = vmatpush1.msra.mxu0 %v158
    %194 = vmatprep.subr.mxu0 0.0
    %195 = vmatpush1.msra.mxu0 %v159
    %196 = vmatprep.subr.mxu0 0.0
    %197 = vmatpush1.msra.mxu0 %v160
    %198 = vmatprep.subr.mxu0 0.0
    %199 = vmatpush1.msra.mxu0 %v161
    %200 = vmatprep.subr.mxu0 0.0
    %201 = vmatpush1.msra.mxu0 %v162
    %202 = vmatprep.subr.mxu0 0.0
    %203 = vmatpush1.msra.mxu0 0.0
    %204 = vmatprep.subr.mxu0 0.0
    %205 = vmatpush1.msra.mxu0 0.0
    %206 = vmatprep.subr.mxu0 0.0
    %207 = vmatpush1.msra.mxu0 0.0
    %208 = vmatprep.subr.mxu0 0.0
    %209 = vmatpush1.msra.mxu0 0.0
    %210 = vmatprep.subr.mxu0 0.0
    %211 = vmatpush1.msra.mxu0 0.0
    %212 = vmatprep.subr.mxu0 0.0
    %213 = vmatpush1.msra.mxu0 0.0
    %214 = vmatprep.subr.mxu0 0.0
    %215 = vmatpush1.msra.mxu0 0.0
    %216 = vmatprep.subr.mxu0 0.0
    %217 = vmatpush1.msra.mxu0 0.0
    %218 = vmatprep.subr.mxu0 0.0
    %219 = vmatpush1.msra.mxu0 0.0
    %220 = vmatprep.subr.mxu0 0.0
    %221 = vmatpush1.msra.mxu0 0.0
    %222 = vmatprep.subr.mxu0 0.0
    %223 = vmatpush1.msra.mxu0 0.0
    %224 = vmatprep.subr.mxu0 0.0
    %225 = vmatpush1.msra.mxu0 0.0
    %226 = vmatprep.subr.mxu0 0.0
    %227 = vmatpush1.msra.mxu0 0.0
    %228 = vmatprep.subr.mxu0 0.0
    %229 = vmatpush1.msra.mxu0 0.0
    %230 = vmatprep.subr.mxu0 0.0
    %231 = vmatpush1.msra.mxu0 0.0
    %232 = vmatprep.subr.mxu0 0.0
    %233 = vmatpush1.msra.mxu0 0.0
    %234 = vmatprep.mubr.f32.mxu0 0.0
    %235 = vmatmul.mubr.f32.gmra.mrb[0].mxu0 %v139
    %v236 = vpop.f32.mrb[0].mxu0
    %v237 = vadd.f32 %v168, %v236
    %v238 = vpop.f32.mrb[0].mxu0
    %239 = vmatprep.mubr.f32.mxu0 0.0
    %240 = vmatmul.mubr.f32.gmra.mrb[0].mxu0 %v144
    %v241 = vpop.f32.mrb[0].mxu0
    %v242 = vadd.f32 %v168, %v241
    %v243 = vpop.f32.mrb[0].mxu0
    %244 = vdwg.mxu0
    %v245 = vmax.f32 %v237, 0.0
    %v246 = vmax.f32 %v242, 0.0
    %247 = vst [vmem:[#allocation8] sm:$0xff] %v245
    %248 = vst [vmem:[#allocation8 + $0x8] sm:$0xff] %v246
    // Predicated region
    $region30: #{tpu_custom_call.1} parent=1 // pred_check
      _
    $region31: #{tpu_custom_call.1} parent=1 // pred_check_branch
      %250 = sbr.rel (0) target = $region33
    $region32: #{tpu_custom_call.1} parent=1 // pred_region
      %s252 = ssub.s32 256, 256
      %253 = vsyncadd [#allocation4], %s252
      %s254 = sshll.u32 [#allocation8], 4
      %s255 = int_to_ptr.vmem [resolvable:$true] %s254
      %260 = dma.vmem_to_hbm [thread:$0]  %s255, 256, %s4, [#allocation4], 128, 128, 8
    $region33: #{tpu_custom_call.1} parent=1 // pred_fallthru
      _
    // Predicated region
    $region34: #{tpu_custom_call.1} parent=1 // pred_check
      _
    $region35: #{tpu_custom_call.1} parent=1 // pred_check_branch
      %262 = sbr.rel (0) target = $region37
    $region36: #{tpu_custom_call.1} parent=1 // pred_region
      %263 = dma.done [#allocation4], 256
    $region37: #{tpu_custom_call.1} parent=1 // pred_fallthru
      _
    %264 = vsyncpa [#allocation3], 1
    %265 = vsyncpa [#allocation6], 1
    %266 = vsyncpa [#allocation4], 1

</llo_original>
